<compile_context>
chip_gen: v7x
topology: tpu7x:2x2x1
jax: 0.10.0
libtpu: 0.0.40
codegen_flags: <defaults>
</compile_context>

<pallas_src>
import functools

import jax
import jax.numpy as jnp
from jax.experimental import pallas as pl
from jax.experimental.pallas import tpu as pltpu


def _round_up(x: int, m: int) -> int:
    return (x + m - 1) // m * m


def prefix_encoder_kernel(ids_ref, emb_ref, w1_ref, b1_ref, w2_ref, b2_ref,
                          out_ref, h_ref):
    # --- compute h = tanh(emb[ids] @ W1 + b1) once, keep it in VMEM scratch ---
    @pl.when(pl.program_id(0) == 0)
    def _():
        ids = ids_ref[...]                                   # (Npad, 1) int32
        n = ids.shape[0]
        vocab = emb_ref.shape[0]
        # Exact embedding gather as one-hot @ table (MXU-friendly, tiny vocab).
        col = jax.lax.broadcasted_iota(jnp.int32, (n, vocab), 1)
        onehot = (col == ids).astype(emb_ref.dtype)          # (Npad, V) bf16
        x = jnp.dot(onehot, emb_ref[...],
                    preferred_element_type=jnp.float32)       # (Npad, H) f32
        pre = jnp.dot(x.astype(w1_ref.dtype), w1_ref[...],
                      preferred_element_type=jnp.float32) + b1_ref[...]
        h_ref[...] = jnp.tanh(pre)                            # f32 scratch

    # --- per D-tile: y = h @ W2[:, tile] + b2[tile] ---
    y = jnp.dot(h_ref[...].astype(w2_ref.dtype), w2_ref[...],
                preferred_element_type=jnp.float32) + b2_ref[...]
    out_ref[...] = y.astype(out_ref.dtype)


@functools.partial(jax.jit, static_argnames=("d_tile_max",))
def prefix_encoder_forward(prefix, emb_table, w1, b1, w2, b2, *, d_tile_max=2048):
    """prefix: (B, P) int32 ids -> (B, P, 2*layers*hidden) float32."""
    B, P = prefix.shape
    V, H = emb_table.shape
    Ph = w1.shape[1]
    D = w2.shape[1]

    N = B * P
    Npad = _round_up(N, 8)                 # f32 sublane multiple
    Phpad = _round_up(Ph, 128)             # lane-dense intermediate
    Dpad128 = _round_up(D, 128)
    tD = Dpad128 if Dpad128 <= d_tile_max else d_tile_max
    Dpad = _round_up(Dpad128, tD)
    num_d_tiles = Dpad // tD

    # Flatten + pad ids (pad rows use id 0 -> valid row, sliced off below).
    ids = jnp.zeros((Npad, 1), jnp.int32).at[:N, 0].set(
        prefix.reshape(N).astype(jnp.int32))

    # bf16 weights (f32 accumulation in-kernel); f32 biases; zero padding.
    emb_bf = emb_table.astype(jnp.bfloat16)
    w1_p = jnp.zeros((H, Phpad), jnp.bfloat16).at[:, :Ph].set(
        w1.astype(jnp.bfloat16))
    b1_p = jnp.zeros((1, Phpad), jnp.float32).at[:, :Ph].set(
        b1.reshape(1, Ph).astype(jnp.float32))
    w2_p = jnp.zeros((Phpad, Dpad), jnp.bfloat16).at[:Ph, :D].set(
        w2.astype(jnp.bfloat16))
    b2_p = jnp.zeros((1, Dpad), jnp.float32).at[:, :D].set(
        b2.reshape(1, D).astype(jnp.float32))

    # Explicit VMEM budget: double-buffered blocked operands + resident arrays.
    bytes_needed = (
        2 * Phpad * tD * 2          # W2 tile (bf16), double-buffered
        + 2 * tD * 4                # b2 tile (f32)
        + 2 * Npad * tD * 4         # out tile (f32), double-buffered
        + 2 * (V * H * 2 + H * Phpad * 2 + Phpad * 4 + Npad * 4)  # resident ins
        + Npad * Phpad * 4          # h scratch (f32)
    )
    vmem_limit = min(int(bytes_needed * 2) + (4 << 20), 64 << 20)

    out = pl.pallas_call(
        prefix_encoder_kernel,
        out_shape=jax.ShapeDtypeStruct((Npad, Dpad), jnp.float32),
        grid=(num_d_tiles,),
        in_specs=[
            pl.BlockSpec((Npad, 1), lambda j: (0, 0)),      # ids
            pl.BlockSpec((V, H), lambda j: (0, 0)),         # embedding table
            pl.BlockSpec((H, Phpad), lambda j: (0, 0)),     # W1
            pl.BlockSpec((1, Phpad), lambda j: (0, 0)),     # b1
            pl.BlockSpec((Phpad, tD), lambda j: (0, j)),    # W2 (D-tiled)
            pl.BlockSpec((1, tD), lambda j: (0, j)),        # b2 (D-tiled)
        ],
        out_specs=pl.BlockSpec((Npad, tD), lambda j: (0, j)),
        scratch_shapes=[pltpu.VMEM((Npad, Phpad), jnp.float32)],  # persistent h
        compiler_params=pltpu.CompilerParams(
            # "arbitrary": step 0 fills the h scratch that later steps reuse.
            dimension_semantics=("arbitrary",),
            vmem_limit_bytes=vmem_limit,
        ),
    )(ids, emb_bf, w1_p, b1_p, w2_p, b2_p)

    return out[:N, :D].reshape(B, P, D)


def make_params(key, pre_seq_len, hidden, prefix_hidden, num_layers):
    """Deterministic synthetic parameters (W stored as (in, out))."""
    d_out = num_layers * 2 * hidden
    k = jax.random.split(key, 5)
    emb = jax.random.normal(k[0], (pre_seq_len, hidden), jnp.float32) * 0.02
    w1 = jax.random.normal(k[1], (hidden, prefix_hidden), jnp.float32) * (hidden ** -0.5)
    b1 = jax.random.normal(k[2], (prefix_hidden,), jnp.float32) * 0.01
    w2 = jax.random.normal(k[3], (prefix_hidden, d_out), jnp.float32) * (prefix_hidden ** -0.5)
    b2 = jax.random.normal(k[4], (d_out,), jnp.float32) * 0.01
    return emb, w1, b1, w2, b2


def reference_forward(prefix, emb, w1, b1, w2, b2):
    x = jnp.take(emb, prefix, axis=0)                        # (B, P, H)
    h = jnp.tanh(x @ w1 + b1)
    return h @ w2 + b2


if __name__ == "__main__":
    # Small config consistent with the module.
    batch = 2
    prefix_len = 8            # "prefix-length"
    pre_seq_len = 16          # embedding vocab size
    hidden = 32
    prefix_hidden = 64
    num_layers = 2            # -> output dim = 2 * 2 * 32 = 128

    key = jax.random.PRNGKey(0)
    k_ids, k_params = jax.random.split(key)

    prefix = jax.random.randint(k_ids, (batch, prefix_len), 0, pre_seq_len, jnp.int32)
    emb, w1, b1, w2, b2 = make_params(k_params, pre_seq_len, hidden,
                                      prefix_hidden, num_layers)

    out = prefix_encoder_forward(prefix, emb, w1, b1, w2, b2)
    out = jax.block_until_ready(out)

    ref = reference_forward(prefix, emb, w1, b1, w2, b2)
    assert out.shape == (batch, prefix_len, num_layers * 2 * hidden)
    # Tolerance loosened vs the pure-f32 version: weights are bf16 in-kernel.
    assert jnp.allclose(out, ref, atol=1e-2, rtol=1e-2), (
        float(jnp.max(jnp.abs(out - ref))))

    print("KERNEL_OK")
</pallas_src>

<mosaic_0001>
module attributes {stable_mosaic.version = 11 : i64} {
  func.func @prefix_encoder_kernel(%arg0: i32, %arg1: memref<16x1xi32, #tpu.memory_space<vmem>>, %arg2: memref<16x32xbf16, #tpu.memory_space<vmem>>, %arg3: memref<32x128xbf16, #tpu.memory_space<vmem>>, %arg4: memref<1x128xf32, #tpu.memory_space<vmem>>, %arg5: memref<128x128xbf16, #tpu.memory_space<vmem>>, %arg6: memref<1x128xf32, #tpu.memory_space<vmem>>, %arg7: memref<16x128xf32, #tpu.memory_space<vmem>>, %arg8: memref<16x128xf32, #tpu.memory_space<vmem>>) attributes {dimension_semantics = [#tpu.dimension_semantics<arbitrary>], iteration_bounds = array<i64: 1>, scalar_prefetch = 0 : i64, scratch_operands = 1 : i64, tpu.core_type = #tpu.core_type<tc>, window_params = [{pipeline_mode = #tpu.pipeline_mode<synchronous>, transform_indices = @transform_0, window_bounds = array<i64: 16, 1>}, {pipeline_mode = #tpu.pipeline_mode<synchronous>, transform_indices = @transform_1, window_bounds = array<i64: 16, 32>}, {pipeline_mode = #tpu.pipeline_mode<synchronous>, transform_indices = @transform_2, window_bounds = array<i64: 32, 128>}, {pipeline_mode = #tpu.pipeline_mode<synchronous>, transform_indices = @transform_3, window_bounds = array<i64: 1, 128>}, {transform_indices = @transform_4, window_bounds = array<i64: 128, 128>}, {transform_indices = @transform_5, window_bounds = array<i64: 1, 128>}, {transform_indices = @transform_6, window_bounds = array<i64: 16, 128>}]} {
    %c0_i32 = arith.constant 0 : i32
    %0 = arith.cmpi eq, %arg0, %c0_i32 : i32
    %1 = arith.extui %0 : i1 to i32
    %c0_i32_0 = arith.constant 0 : i32
    %2 = arith.cmpi ne, %1, %c0_i32_0 : i32
    scf.if %2 {
      %c0_8 = arith.constant 0 : index
      %c0_9 = arith.constant 0 : index
      %11 = vector.load %arg1[%c0_8, %c0_9] : memref<16x1xi32, #tpu.memory_space<vmem>>, vector<16x1xi32>
      %12 = tpu.iota {dimensions = array<i32: 1>} : vector<16x16xi32>
      %13 = vector.broadcast %11 : vector<16x1xi32> to vector<16x16xi32>
      %14 = arith.cmpi eq, %12, %13 : vector<16x16xi32>
      %15 = arith.extui %14 : vector<16x16xi1> to vector<16x16xi32>
      %16 = arith.sitofp %15 : vector<16x16xi32> to vector<16x16xf32>
      %17 = arith.truncf %16 : vector<16x16xf32> to vector<16x16xbf16>
      %c0_10 = arith.constant 0 : index
      %c0_11 = arith.constant 0 : index
      %18 = vector.load %arg2[%c0_10, %c0_11] : memref<16x32xbf16, #tpu.memory_space<vmem>>, vector<16x32xbf16>
      %cst_12 = arith.constant dense<0.000000e+00> : vector<16x32xf32>
      %19 = tpu.matmul %17, %18, %cst_12 {dimension_numbers = #tpu.dot_dimension_numbers<[1], [0], [0], [1], [0, 0, 1, 1], [], []>} : vector<16x16xbf16>, vector<16x32xbf16>, vector<16x32xf32> -> vector<16x32xf32>
      %20 = arith.truncf %19 : vector<16x32xf32> to vector<16x32xbf16>
      %c0_13 = arith.constant 0 : index
      %c0_14 = arith.constant 0 : index
      %21 = vector.load %arg3[%c0_13, %c0_14] : memref<32x128xbf16, #tpu.memory_space<vmem>>, vector<32x128xbf16>
      %cst_15 = arith.constant dense<0.000000e+00> : vector<16x128xf32>
      %22 = tpu.matmul %20, %21, %cst_15 {dimension_numbers = #tpu.dot_dimension_numbers<[1], [0], [0], [1], [0, 0, 1, 1], [], []>} : vector<16x32xbf16>, vector<32x128xbf16>, vector<16x128xf32> -> vector<16x128xf32>
      %c0_16 = arith.constant 0 : index
      %c0_17 = arith.constant 0 : index
      %23 = vector.load %arg4[%c0_16, %c0_17] : memref<1x128xf32, #tpu.memory_space<vmem>>, vector<1x128xf32>
      %24 = vector.broadcast %23 : vector<1x128xf32> to vector<16x128xf32>
      %25 = arith.addf %22, %24 : vector<16x128xf32>
      %26 = math.tanh %25 : vector<16x128xf32>
      %c0_18 = arith.constant 0 : index
      %c0_19 = arith.constant 0 : index
      %27 = vector.load %arg8[%c0_18, %c0_19] : memref<16x128xf32, #tpu.memory_space<vmem>>, vector<16x128xf32>
      tpu.vector_store %arg8[%c0_18, %c0_19], %26 {strides = array<i32>} : memref<16x128xf32, #tpu.memory_space<vmem>>, vector<16x128xf32>,
    } else {
    }
    %c0 = arith.constant 0 : index
    %c0_1 = arith.constant 0 : index
    %3 = vector.load %arg8[%c0, %c0_1] : memref<16x128xf32, #tpu.memory_space<vmem>>, vector<16x128xf32>
    %4 = arith.truncf %3 : vector<16x128xf32> to vector<16x128xbf16>
    %c0_2 = arith.constant 0 : index
    %c0_3 = arith.constant 0 : index
    %5 = vector.load %arg5[%c0_2, %c0_3] : memref<128x128xbf16, #tpu.memory_space<vmem>>, vector<128x128xbf16>
    %cst = arith.constant dense<0.000000e+00> : vector<16x128xf32>
    %6 = tpu.matmul %4, %5, %cst {dimension_numbers = #tpu.dot_dimension_numbers<[1], [0], [0], [1], [0, 0, 1, 1], [], []>} : vector<16x128xbf16>, vector<128x128xbf16>, vector<16x128xf32> -> vector<16x128xf32>
    %c0_4 = arith.constant 0 : index
    %c0_5 = arith.constant 0 : index
    %7 = vector.load %arg6[%c0_4, %c0_5] : memref<1x128xf32, #tpu.memory_space<vmem>>, vector<1x128xf32>
    %8 = vector.broadcast %7 : vector<1x128xf32> to vector<16x128xf32>
    %9 = arith.addf %6, %8 : vector<16x128xf32>
    %c0_6 = arith.constant 0 : index
    %c0_7 = arith.constant 0 : index
    %10 = vector.load %arg7[%c0_6, %c0_7] : memref<16x128xf32, #tpu.memory_space<vmem>>, vector<16x128xf32>
    tpu.vector_store %arg7[%c0_6, %c0_7], %9 {strides = array<i32>} : memref<16x128xf32, #tpu.memory_space<vmem>>, vector<16x128xf32>,
    return
  }
  func.func @transform_0(%arg0: i32) -> (i32, i32) {
    %c0_i32 = arith.constant 0 : i32
    %c0_i32_0 = arith.constant 0 : i32
    %c0_i32_1 = arith.constant 0 : i32
    return %c0_i32, %c0_i32_0 : i32, i32
  }
  func.func @transform_1(%arg0: i32) -> (i32, i32) {
    %c0_i32 = arith.constant 0 : i32
    %c0_i32_0 = arith.constant 0 : i32
    %c0_i32_1 = arith.constant 0 : i32
    return %c0_i32, %c0_i32_0 : i32, i32
  }
  func.func @transform_2(%arg0: i32) -> (i32, i32) {
    %c0_i32 = arith.constant 0 : i32
    %c0_i32_0 = arith.constant 0 : i32
    %c0_i32_1 = arith.constant 0 : i32
    return %c0_i32, %c0_i32_0 : i32, i32
  }
  func.func @transform_3(%arg0: i32) -> (i32, i32) {
    %c0_i32 = arith.constant 0 : i32
    %c0_i32_0 = arith.constant 0 : i32
    %c0_i32_1 = arith.constant 0 : i32
    return %c0_i32, %c0_i32_0 : i32, i32
  }
  func.func @transform_4(%arg0: i32) -> (i32, i32) {
    %c0_i32 = arith.constant 0 : i32
    %c0_i32_0 = arith.constant 0 : i32
    return %c0_i32, %arg0 : i32, i32
  }
  func.func @transform_5(%arg0: i32) -> (i32, i32) {
    %c0_i32 = arith.constant 0 : i32
    %c0_i32_0 = arith.constant 0 : i32
    return %c0_i32, %arg0 : i32, i32
  }
  func.func @transform_6(%arg0: i32) -> (i32, i32) {
    %c0_i32 = arith.constant 0 : i32
    %c0_i32_0 = arith.constant 0 : i32
    return %c0_i32, %arg0 : i32, i32
  }
}

</mosaic_0001>

<llo_original>
// kernel: prefix_encoder_forward.1
$region0: #{prefix_encoder_forward.1}
  #allocation0 [shape = 'u32[]', space=smem, size = 0x4, offset = 0x4, fixed_abs, tag = 'smem constant byte address 0x4 - core index']
  #allocation1 [shape = 'u32[144,128]{1,0:T(1,128)}', space=vmem, size = 0x12000, scoped, tag = 'internal scratch']
  #allocation2 [shape = 'f32[16,128]{1,0:T(8,128)}', space=vmem, size = 0x2000, scoped, tag = 'scratch operand']
  %s0 = inlined_call_operand.vmem [shape: s32[16,1], index: 0, kind: input, shape index: {}]
  %s1 = inlined_call_operand.vmem [shape: bf16[16,32], index: 1, kind: input, shape index: {}]
  %s2 = inlined_call_operand.vmem [shape: bf16[32,128], index: 2, kind: input, shape index: {}]
  %s3 = inlined_call_operand.vmem [shape: f32[1,128], index: 3, kind: input, shape index: {}]
  %s4 = inlined_call_operand.vmem [shape: bf16[128,128], index: 4, kind: input, shape index: {}]
  %s5 = inlined_call_operand.vmem [shape: f32[1,128], index: 5, kind: input, shape index: {}]
  %s6 = inlined_call_operand.hbm [shape: f32[16,128], index: 6, kind: output, shape index: {}]
  %s7 = sld [smem:[#allocation0]]
  $region38: #{prefix_encoder_forward.1} parent=0
    _
  %s9 = ssub.s32 1, %s7
  %s10 = scalar_select 0, %s9, %s7
  $region1: #{prefix_encoder_forward.1} parent=0
    #allocation3 [shape = 'u8[8192]{0}', space=vmem, size = 0x2000, scoped, tag = 'output window, operand 0, single buffered']
    #allocation4 [shape = 's32[1]{0}', space=sflag, size = 0x4, scoped, tag = 'scoped memory for prefix_encoder_forward.1']
    %11 = vsyncpa [#allocation4], 0
    // Predicated region
    $region2: #{prefix_encoder_forward.1} parent=1 // pred_check
      _
    $region3: #{prefix_encoder_forward.1} parent=1 // pred_check_branch
      %13 = sbr.rel (0) target = $region5
    $region4: #{prefix_encoder_forward.1} parent=1 // pred_region
      _
    $region5: #{prefix_encoder_forward.1} parent=1 // pred_fallthru
      _
    // Predicated region
    $region6: #{prefix_encoder_forward.1} parent=1 // pred_check
      _
    $region7: #{prefix_encoder_forward.1} parent=1 // pred_check_branch
      %15 = sbr.rel (0) target = $region9
    $region8: #{prefix_encoder_forward.1} parent=1 // pred_region
      _
    $region9: #{prefix_encoder_forward.1} parent=1 // pred_fallthru
      _
    // Predicated region
    $region10: #{prefix_encoder_forward.1} parent=1 // pred_check
      _
    $region11: #{prefix_encoder_forward.1} parent=1 // pred_check_branch
      %17 = sbr.rel (0) target = $region13
    $region12: #{prefix_encoder_forward.1} parent=1 // pred_region
      _
    $region13: #{prefix_encoder_forward.1} parent=1 // pred_fallthru
      _
    // Predicated region
    $region14: #{prefix_encoder_forward.1} parent=1 // pred_check
      _
    $region15: #{prefix_encoder_forward.1} parent=1 // pred_check_branch
      %19 = sbr.rel (0) target = $region17
    $region16: #{prefix_encoder_forward.1} parent=1 // pred_region
      _
    $region17: #{prefix_encoder_forward.1} parent=1 // pred_fallthru
      _
    // Predicated region
    $region18: #{prefix_encoder_forward.1} parent=1 // pred_check
      _
    $region19: #{prefix_encoder_forward.1} parent=1 // pred_check_branch
      %21 = sbr.rel (0) target = $region21
    $region20: #{prefix_encoder_forward.1} parent=1 // pred_region
      _
    $region21: #{prefix_encoder_forward.1} parent=1 // pred_fallthru
      _
    // Predicated region
    $region22: #{prefix_encoder_forward.1} parent=1 // pred_check
      _
    $region23: #{prefix_encoder_forward.1} parent=1 // pred_check_branch
      %23 = sbr.rel (0) target = $region25
    $region24: #{prefix_encoder_forward.1} parent=1 // pred_region
      _
    $region25: #{prefix_encoder_forward.1} parent=1 // pred_fallthru
      _
    %p25 = scmp.eq.s32.totalorder 0, 0
    // Predicated region
    $region26: #{prefix_encoder_forward.1} parent=1 // pred_check
      %p26 = pneg %p25
    $region27: #{prefix_encoder_forward.1} parent=1 // pred_check_branch
      %28 = sbr.rel (%p26) target = $region29
    $region28: #{prefix_encoder_forward.1} parent=1 // pred_region
      %v29 = vld [vmem:[%s0] sm:$0xff]
      %v30 = vld [vmem:[%s0 + $0x8] sm:$0xff]
      %v31 = vlaneseq
      %v32 = vand.u32 %v31, 127
      %33 = vset.pattern.permute.xlu0 0
      %34 = vperm.xlu0 %33, %v29
      %v35 = vpop.permute.xlu0 %34
      %36 = vset.pattern.permute.xlu0 0
      %37 = vperm.xlu0 %36, %v30
      %v38 = vpop.permute.xlu0 %37
      %vm39 = vcmp.eq.s32.totalorder %v32, %v35
      %vm40 = vcmp.eq.s32.totalorder %v32, %v38
      %v41 = vsel %vm39, 1, 0
      %v42 = vsel %vm40, 1, 0
      %v43 = vcvt.s32.f32 %v41
      %v44 = vcvt.s32.f32 %v42
      %v45 = vpack.c.bf16 %v44, %v43
      %v46 = vld [vmem:[%s1] sm:$0xf]
      %v47 = vld [vmem:[%s1 + $0x4] sm:$0xf]
      %v50 = vunpack.c.l.b16 %v46
      %v51 = vunpack.c.l.b16 %v47
      %v52 = vpack.c.b16 %v51, %v50
      %vm54 = vcmask 130048
      %v56 = vsel %vm54, %v45, 0
      %58 = vmatprep.subr.bf16.mxu0 0
      %59 = vmatpush1.bf16.msra.mxu0 %v52
      %60 = vmatprep.subr.bf16.mxu0 0
      %61 = vmatpush1.bf16.msra.mxu0 0
      %62 = vmatprep.subr.bf16.mxu0 0
      %63 = vmatpush1.bf16.msra.mxu0 0
      %64 = vmatprep.subr.bf16.mxu0 0
      %65 = vmatpush1.bf16.msra.mxu0 0
      %66 = vmatprep.subr.bf16.mxu0 0
      %67 = vmatpush1.bf16.msra.mxu0 0
      %68 = vmatprep.subr.bf16.mxu0 0
      %69 = vmatpush1.bf16.msra.mxu0 0
      %70 = vmatprep.subr.bf16.mxu0 0
      %71 = vmatpush1.bf16.msra.mxu0 0
      %72 = vmatprep.subr.bf16.mxu0 0
      %73 = vmatpush1.bf16.msra.mxu0 0
      %74 = vmatprep.subr.bf16.mxu0 0
      %75 = vmatpush1.bf16.msra.mxu0 0
      %76 = vmatprep.subr.bf16.mxu0 0
      %77 = vmatpush1.bf16.msra.mxu0 0
      %78 = vmatprep.subr.bf16.mxu0 0
      %79 = vmatpush1.bf16.msra.mxu0 0
      %80 = vmatprep.subr.bf16.mxu0 0
      %81 = vmatpush1.bf16.msra.mxu0 0
      %82 = vmatprep.subr.bf16.mxu0 0
      %83 = vmatpush1.bf16.msra.mxu0 0
      %84 = vmatprep.subr.bf16.mxu0 0
      %85 = vmatpush1.bf16.msra.mxu0 0
      %86 = vmatprep.subr.bf16.mxu0 0
      %87 = vmatpush1.bf16.msra.mxu0 0
      %88 = vmatprep.subr.bf16.mxu0 0
      %89 = vmatpush1.bf16.msra.mxu0 0
      %90 = vmatprep.mubr.bf16.mxu0 0
      %91 = vmatmul.mubr.bf16.gmra.mrb[0].mxu0 %v56
      %v92 = vpop.f32.mrb[0].mxu0
      %v93 = vadd.f32 0.0, %v92
      %v94 = vpop.f32.mrb[0].mxu0
      %v95 = vpop.f32.mrb[0].mxu0
      %v96 = vadd.f32 0.0, %v95
      %v97 = vpop.f32.mrb[0].mxu0
      %98 = vdwg.mxu0
      %v99 = vpack.c.bf16 %v96, %v93
      %v100 = vld [vmem:[%s2] sm:$0xf]
      %v101 = vld [vmem:[%s2 + $0x4] sm:$0xf]
      %v102 = vld [vmem:[%s2 + $0x8] sm:$0xf]
      %v103 = vld [vmem:[%s2 + $0xc] sm:$0xf]
      %v104 = vld [vmem:[%s3] sm:$0x1]
      %v106 = vlaneseq
      %v107 = vshrl.u32 %v106, 7
      %v108 = vsub.s32 0, %v107
      %v109 = vrot.slane %v104, %v108
      %v115 = vunpack.c.l.b16 %v100
      %v116 = vunpack.c.l.b16 %v101
      %v117 = vunpack.c.l.b16 %v102
      %v118 = vunpack.c.l.b16 %v103
      %v119 = vpack.c.b16 %v116, %v115
      %v120 = vpack.c.b16 %v118, %v117
      %vm123 = vcmask 261120
      %v125 = vsel %vm123, %v99, 0
      %127 = vmatprep.subr.bf16.mxu0 0
      %128 = vmatpush1.bf16.msra.mxu0 %v119
      %129 = vmatprep.subr.bf16.mxu0 0
      %130 = vmatpush1.bf16.msra.mxu0 %v120
      %131 = vmatprep.subr.bf16.mxu0 0
      %132 = vmatpush1.bf16.msra.mxu0 0
      %133 = vmatprep.subr.bf16.mxu0 0
      %134 = vmatpush1.bf16.msra.mxu0 0
      %135 = vmatprep.subr.bf16.mxu0 0
      %136 = vmatpush1.bf16.msra.mxu0 0
      %137 = vmatprep.subr.bf16.mxu0 0
      %138 = vmatpush1.bf16.msra.mxu0 0
      %139 = vmatprep.subr.bf16.mxu0 0
      %140 = vmatpush1.bf16.msra.mxu0 0
      %141 = vmatprep.subr.bf16.mxu0 0
      %142 = vmatpush1.bf16.msra.mxu0 0
      %143 = vmatprep.subr.bf16.mxu0 0
      %144 = vmatpush1.bf16.msra.mxu0 0
      %145 = vmatprep.subr.bf16.mxu0 0
      %146 = vmatpush1.bf16.msra.mxu0 0
      %147 = vmatprep.subr.bf16.mxu0 0
      %148 = vmatpush1.bf16.msra.mxu0 0
      %149 = vmatprep.subr.bf16.mxu0 0
      %150 = vmatpush1.bf16.msra.mxu0 0
      %151 = vmatprep.subr.bf16.mxu0 0
      %152 = vmatpush1.bf16.msra.mxu0 0
      %153 = vmatprep.subr.bf16.mxu0 0
      %154 = vmatpush1.bf16.msra.mxu0 0
      %155 = vmatprep.subr.bf16.mxu0 0
      %156 = vmatpush1.bf16.msra.mxu0 0
      %157 = vmatprep.subr.bf16.mxu0 0
      %158 = vmatpush1.bf16.msra.mxu0 0
      %159 = vmatprep.mubr.bf16.mxu0 0
      %160 = vmatmul.mubr.bf16.gmra.mrb[0].mxu0 %v125
      %v161 = vpop.f32.mrb[0].mxu0
      %v162 = vadd.f32 %v109, %v161
      %v163 = vpop.f32.mrb[0].mxu0
      %v164 = vpop.f32.mrb[0].mxu0
      %v165 = vadd.f32 %v109, %v164
      %v166 = vpop.f32.mrb[0].mxu0
      %167 = vdwg.mxu0
      %v168 = vtanh.pop %v162
      %v169 = vtanh.pop %v165
      %170 = vst [vmem:[#allocation2] sm:$0xff] %v168
      %171 = vst [vmem:[#allocation2 + $0x8] sm:$0xff] %v169
    $region29: #{prefix_encoder_forward.1} parent=1 // pred_fallthru
      _
    %v172 = vld [vmem:[#allocation2] sm:$0xff]
    %v173 = vld [vmem:[#allocation2 + $0x8] sm:$0xff]
    %v174 = vpack.c.bf16 %v173, %v172
    %v175 = vld [vmem:[%s4] sm:$0xf]
    %v176 = vld [vmem:[%s4 + $0x4] sm:$0xf]
    %v177 = vld [vmem:[%s4 + $0x8] sm:$0xf]
    %v178 = vld [vmem:[%s4 + $0xc] sm:$0xf]
    %v179 = vld [vmem:[%s4 + $0x10] sm:$0xf]
    %v180 = vld [vmem:[%s4 + $0x14] sm:$0xf]
    %v181 = vld [vmem:[%s4 + $0x18] sm:$0xf]
    %v182 = vld [vmem:[%s4 + $0x1c] sm:$0xf]
    %v183 = vld [vmem:[%s4 + $0x20] sm:$0xf]
    %v184 = vld [vmem:[%s4 + $0x24] sm:$0xf]
    %v185 = vld [vmem:[%s4 + $0x28] sm:$0xf]
    %v186 = vld [vmem:[%s4 + $0x2c] sm:$0xf]
    %v187 = vld [vmem:[%s4 + $0x30] sm:$0xf]
    %v188 = vld [vmem:[%s4 + $0x34] sm:$0xf]
    %v189 = vld [vmem:[%s4 + $0x38] sm:$0xf]
    %v190 = vld [vmem:[%s4 + $0x3c] sm:$0xf]
    %v191 = vld [vmem:[%s5] sm:$0x1]
    %v193 = vlaneseq
    %v194 = vshrl.u32 %v193, 7
    %v195 = vsub.s32 0, %v194
    %v196 = vrot.slane %v191, %v195
    %v214 = vunpack.c.l.b16 %v175
    %v215 = vunpack.c.l.b16 %v176
    %v216 = vunpack.c.l.b16 %v177
    %v217 = vunpack.c.l.b16 %v178
    %v218 = vunpack.c.l.b16 %v179
    %v219 = vunpack.c.l.b16 %v180
    %v220 = vunpack.c.l.b16 %v181
    %v221 = vunpack.c.l.b16 %v182
    %v222 = vunpack.c.l.b16 %v183
    %v223 = vunpack.c.l.b16 %v184
    %v224 = vunpack.c.l.b16 %v185
    %v225 = vunpack.c.l.b16 %v186
    %v226 = vunpack.c.l.b16 %v187
    %v227 = vunpack.c.l.b16 %v188
    %v228 = vunpack.c.l.b16 %v189
    %v229 = vunpack.c.l.b16 %v190
    %v230 = vpack.c.b16 %v215, %v214
    %v231 = vpack.c.b16 %v217, %v216
    %v232 = vpack.c.b16 %v219, %v218
    %v233 = vpack.c.b16 %v221, %v220
    %v234 = vpack.c.b16 %v223, %v222
    %v235 = vpack.c.b16 %v225, %v224
    %v236 = vpack.c.b16 %v227, %v226
    %v237 = vpack.c.b16 %v229, %v228
    %246 = vmatprep.subr.bf16.mxu0 0
    %247 = vmatpush1.bf16.msra.mxu0 %v230
    %248 = vmatprep.subr.bf16.mxu0 0
    %249 = vmatpush1.bf16.msra.mxu0 %v231
    %250 = vmatprep.subr.bf16.mxu0 0
    %251 = vmatpush1.bf16.msra.mxu0 %v232
    %252 = vmatprep.subr.bf16.mxu0 0
    %253 = vmatpush1.bf16.msra.mxu0 %v233
    %254 = vmatprep.subr.bf16.mxu0 0
    %255 = vmatpush1.bf16.msra.mxu0 %v234
    %256 = vmatprep.subr.bf16.mxu0 0
    %257 = vmatpush1.bf16.msra.mxu0 %v235
    %258 = vmatprep.subr.bf16.mxu0 0
    %259 = vmatpush1.bf16.msra.mxu0 %v236
    %260 = vmatprep.subr.bf16.mxu0 0
    %261 = vmatpush1.bf16.msra.mxu0 %v237
    %262 = vmatprep.subr.bf16.mxu0 0
    %263 = vmatpush1.bf16.msra.mxu0 0
    %264 = vmatprep.subr.bf16.mxu0 0
    %265 = vmatpush1.bf16.msra.mxu0 0
    %266 = vmatprep.subr.bf16.mxu0 0
    %267 = vmatpush1.bf16.msra.mxu0 0
    %268 = vmatprep.subr.bf16.mxu0 0
    %269 = vmatpush1.bf16.msra.mxu0 0
    %270 = vmatprep.subr.bf16.mxu0 0
    %271 = vmatpush1.bf16.msra.mxu0 0
    %272 = vmatprep.subr.bf16.mxu0 0
    %273 = vmatpush1.bf16.msra.mxu0 0
    %274 = vmatprep.subr.bf16.mxu0 0
    %275 = vmatpush1.bf16.msra.mxu0 0
    %276 = vmatprep.subr.bf16.mxu0 0
    %277 = vmatpush1.bf16.msra.mxu0 0
    %278 = vmatprep.mubr.bf16.mxu0 0
    %279 = vmatmul.mubr.bf16.gmra.mrb[0].mxu0 %v174
    %v280 = vpop.f32.mrb[0].mxu0
    %v281 = vadd.f32 %v196, %v280
    %v282 = vpop.f32.mrb[0].mxu0
    %v283 = vpop.f32.mrb[0].mxu0
    %v284 = vadd.f32 %v196, %v283
    %v285 = vpop.f32.mrb[0].mxu0
    %286 = vdwg.mxu0
    %287 = vst [vmem:[#allocation3] sm:$0xff] %v281
    %288 = vst [vmem:[#allocation3 + $0x8] sm:$0xff] %v284
    // Predicated region
    $region30: #{prefix_encoder_forward.1} parent=1 // pred_check
      _
    $region31: #{prefix_encoder_forward.1} parent=1 // pred_check_branch
      %290 = sbr.rel (0) target = $region33
    $region32: #{prefix_encoder_forward.1} parent=1 // pred_region
      %s292 = ssub.s32 256, 256
      %293 = vsyncadd [#allocation4], %s292
      %s294 = sshll.u32 [#allocation3], 4
      %s295 = int_to_ptr.vmem [resolvable:$true] %s294
      %300 = dma.vmem_to_hbm [thread:$0]  %s295, 256, %s6, [#allocation4], 128, 128, 8
    $region33: #{prefix_encoder_forward.1} parent=1 // pred_fallthru
      _
    // Predicated region
    $region34: #{prefix_encoder_forward.1} parent=1 // pred_check
      _
    $region35: #{prefix_encoder_forward.1} parent=1 // pred_check_branch
      %302 = sbr.rel (0) target = $region37
    $region36: #{prefix_encoder_forward.1} parent=1 // pred_region
      %303 = dma.done [#allocation4], 256
    $region37: #{prefix_encoder_forward.1} parent=1 // pred_fallthru
      _
    %304 = vsyncpa [#allocation4], 1

</llo_original>
